<compile_context>
chip_gen: v7x
topology: tpu7x:2x2x1
jax: 0.10.0
libtpu: 0.0.40
codegen_flags: <defaults>
</compile_context>

<pallas_src>
import functools
import math

import jax
import jax.numpy as jnp
from jax import lax
from jax.experimental import pallas as pl
from jax.experimental.pallas import tpu as pltpu


def _round_up(n, m):
    return ((n + m - 1) // m) * m


def _pad2d(a, rows, cols):
    pr, pc = rows - a.shape[0], cols - a.shape[1]
    if pr == 0 and pc == 0:
        return a
    return jnp.pad(a, ((0, pr), (0, pc)))


def _gelu_erf(x):
    # nn.functional.gelu default (approximate='none'): 0.5*x*(1+erf(x/sqrt(2)))
    return 0.5 * x * (1.0 + lax.erf(x * (1.0 / math.sqrt(2.0))))


def _gelu_tanh(x):
    # tanh approximation: lands on the EUP slot (free on v6e/v7x), slight drift
    # vs the erf reference.
    c = math.sqrt(2.0 / math.pi)
    return 0.5 * x * (1.0 + jnp.tanh(c * (x + 0.044715 * x * x * x)))


def ffn_kernel(x_ref, w1_ref, b1_ref, w2_ref, b2_ref, o_ref, acc_ref, *, gelu_fn):
    d = pl.program_id(1)

    @pl.when(d == 0)
    def _():
        acc_ref[...] = jnp.zeros_like(acc_ref)

    # ---- c_fc chunk: (tm, Epad) @ (Epad, tD) -> f32 on the MXU ----
    h = jnp.dot(x_ref[...], w1_ref[...], preferred_element_type=jnp.float32)

    # ---- bias + GELU + cast, fused into one VALU sweep (f32 math) ----
    h = gelu_fn(h + b1_ref[...]).astype(w2_ref.dtype)

    # ---- c_proj chunk accumulated into the resident f32 accumulator ----
    acc_ref[...] += jnp.dot(h, w2_ref[...], preferred_element_type=jnp.float32)

    @pl.when(d == pl.num_programs(1) - 1)
    def _():
        o_ref[...] = (acc_ref[...] + b2_ref[...]).astype(o_ref.dtype)


def lora_ffn(x, params, *, tm=512, td=512, compute_dtype=jnp.bfloat16,
             gelu_tanh_approx=False):
    """x: (batch, seq, n_embed) -> (batch, seq, n_embed).  Jit-friendly."""
    B, S, E = x.shape
    out_dtype = x.dtype
    compute_dtype = jnp.dtype(compute_dtype)
    f32 = jnp.float32

    # ---- fold LoRA into dense weights in f32 (exact), transpose to x @ W ----
    w1_eff = (params["w1"].T.astype(f32)
              + params["scale1"] * (params["a1"].astype(f32) @ params["bb1"].astype(f32)))
    w2_eff = (params["w2"].T.astype(f32)
              + params["scale2"] * (params["a2"].astype(f32) @ params["bb2"].astype(f32)))
    D = w1_eff.shape[1]

    # ---- feature padding to lane multiples; choose D chunk size ----
    Epad = _round_up(E, 128)
    Dpad = _round_up(D, 128)
    td_eff = min(_round_up(int(td), 128), Dpad)
    Dpad = _round_up(Dpad, td_eff)
    grid_d = Dpad // td_eff

    # ---- row tiling: sublane multiple of the compute dtype, >=2 M tiles ----
    M = B * S
    sub = max(8, 32 // compute_dtype.itemsize)          # f32->8, bf16->16, 8bit->32
    tm_eff = max(sub, _round_up(min(int(tm), _round_up(M, sub)), sub))
    if M >= 2 * sub and pl.cdiv(M, tm_eff) < 2:
        # Megacore (v7x has 2 TensorCores): make sure the parallel axis splits.
        tm_eff = max(sub, _round_up(pl.cdiv(M, 2), sub))
    Mpad = _round_up(M, tm_eff)
    grid_m = Mpad // tm_eff

    # ---- pad operands (cast before padding to move bf16, not f32) ----
    x2d = _pad2d(x.reshape(M, E).astype(compute_dtype), Mpad, Epad)
    w1p = _pad2d(w1_eff, Epad, Dpad).astype(compute_dtype)
    w2p = _pad2d(w2_eff, Dpad, Epad).astype(compute_dtype)
    b1p = _pad2d(params["b1"].astype(f32)[None, :], 1, Dpad)
    b2p = _pad2d(params["b2"].astype(f32)[None, :], 1, Epad)

    # ---- VMEM budget: double-buffered streams + accumulator + h chunk ----
    wc = compute_dtype.itemsize
    oc = jnp.dtype(out_dtype).itemsize
    est = (2 * tm_eff * Epad * (wc + oc)                  # x / out row tiles
           + 2 * 2 * Epad * td_eff * wc                   # W1 + W2 chunks
           + 2 * (td_eff + Epad) * 4                      # biases (f32)
           + tm_eff * Epad * 4                            # f32 accumulator scratch
           + tm_eff * td_eff * (4 + wc))                  # f32 h chunk + cast copy
    try:
        vmem_cap = int(pltpu.get_tpu_info().vmem_capacity_bytes)
    except Exception:
        vmem_cap = 64 << 20                               # conservative (v7x per-TC)
    vmem_limit = int(min(int(0.75 * vmem_cap), max(32 << 20, 2 * est)))

    gelu_fn = _gelu_tanh if gelu_tanh_approx else _gelu_erf
    kernel = functools.partial(ffn_kernel, gelu_fn=gelu_fn)

    out = pl.pallas_call(
        kernel,
        out_shape=jax.ShapeDtypeStruct((Mpad, Epad), out_dtype),
        grid_spec=pltpu.PrefetchScalarGridSpec(
            num_scalar_prefetch=0,
            grid=(grid_m, grid_d),                        # reduction axis (D) last
            in_specs=[
                pl.BlockSpec((tm_eff, Epad), lambda i, d: (i, 0)),   # x row tile
                pl.BlockSpec((Epad, td_eff), lambda i, d: (0, d)),   # W1_eff col chunk
                pl.BlockSpec((1, td_eff),    lambda i, d: (0, d)),   # b1 chunk
                pl.BlockSpec((td_eff, Epad), lambda i, d: (d, 0)),   # W2_eff row chunk
                pl.BlockSpec((1, Epad),      lambda i, d: (0, 0)),   # b2 (constant)
            ],
            out_specs=pl.BlockSpec((tm_eff, Epad), lambda i, d: (i, 0)),
            scratch_shapes=[pltpu.VMEM((tm_eff, Epad), jnp.float32)],
        ),
        compiler_params=pltpu.CompilerParams(
            dimension_semantics=("parallel", "arbitrary"),
            vmem_limit_bytes=vmem_limit,
        ),
    )(x2d, w1p, b1p, w2p, b2p)

    return out[:M, :E].reshape(B, S, E)


def reference_ffn(x, params):
    """Pure-JAX separate-path (unfused LoRA) reference in f32."""
    def lin(h, w, b, a, bb, s):
        return h @ w.T + b + (h @ a @ bb) * s
    h = lin(x, params["w1"], params["b1"], params["a1"], params["bb1"],
            params["scale1"])
    h = _gelu_erf(h)
    return lin(h, params["w2"], params["b2"], params["a2"], params["bb2"],
               params["scale2"])


def make_params(key, n_embed, dim, r):
    ks = jax.random.split(key, 8)
    scale = 0.02
    return {
        "w1": jax.random.normal(ks[0], (dim, n_embed), jnp.float32) * scale,
        "b1": jax.random.normal(ks[1], (dim,), jnp.float32) * scale,
        "a1": jax.random.normal(ks[2], (n_embed, r), jnp.float32) * scale,
        "bb1": jax.random.normal(ks[3], (r, dim), jnp.float32) * scale,
        "w2": jax.random.normal(ks[4], (n_embed, dim), jnp.float32) * scale,
        "b2": jax.random.normal(ks[5], (n_embed,), jnp.float32) * scale,
        "a2": jax.random.normal(ks[6], (dim, r), jnp.float32) * scale,
        "bb2": jax.random.normal(ks[7], (r, n_embed), jnp.float32) * scale,
        # labml LoRA default: alpha = r  ->  scaling = alpha / r = 1.0
        "scale1": 1.0,
        "scale2": 1.0,
    }


if __name__ == "__main__":
    key = jax.random.PRNGKey(0)
    kx, kp, kx2, kp2 = jax.random.split(key, 4)

    # --- small f32 correctness check (test shapes of the original module) ---
    batch, seq, n_embed, r = 2, 8, 32, 4
    dim = 4 * n_embed
    x = jax.random.normal(kx, (batch, seq, n_embed), jnp.float32)
    params = make_params(kp, n_embed, dim, r)

    ffn_exact = jax.jit(functools.partial(lora_ffn, compute_dtype=jnp.float32))
    y = jax.block_until_ready(ffn_exact(x, params))
    y_ref = reference_ffn(x, params)
    assert y.shape == (batch, seq, n_embed)
    assert jnp.allclose(y, y_ref, atol=1e-4, rtol=1e-4), "f32 mismatch vs reference"

    # --- larger demo: default bf16 compute, multiple M and D tiles, f32 accum ---
    b2_, s2_, e2_, r2_ = 4, 128, 256, 8
    d2_ = 4 * e2_
    x2 = jax.random.normal(kx2, (b2_, s2_, e2_), jnp.float32)
    params2 = make_params(kp2, e2_, d2_, r2_)

    ffn_fast = jax.jit(lora_ffn)     # bf16 compute dtype by default
    y2 = jax.block_until_ready(ffn_fast(x2, params2))
    y2_ref = reference_ffn(x2, params2)
    assert y2.shape == (b2_, s2_, e2_)
    assert jnp.allclose(y2, y2_ref, atol=3e-2, rtol=3e-2), "bf16 mismatch vs reference"

    print("KERNEL_OK")
</pallas_src>

<mosaic_0001>
module attributes {stable_mosaic.version = 11 : i64} {
  func.func @ffn_kernel(%arg0: i32, %arg1: i32, %arg2: memref<8x128xf32, #tpu.memory_space<vmem>>, %arg3: memref<128x128xf32, #tpu.memory_space<vmem>>, %arg4: memref<1x128xf32, #tpu.memory_space<vmem>>, %arg5: memref<128x128xf32, #tpu.memory_space<vmem>>, %arg6: memref<1x128xf32, #tpu.memory_space<vmem>>, %arg7: memref<8x128xf32, #tpu.memory_space<vmem>>, %arg8: memref<8x128xf32, #tpu.memory_space<vmem>>) attributes {dimension_semantics = [#tpu.dimension_semantics<parallel>, #tpu.dimension_semantics<arbitrary>], iteration_bounds = array<i64: 2, 1>, scalar_prefetch = 0 : i64, scratch_operands = 1 : i64, tpu.core_type = #tpu.core_type<tc>, window_params = [{transform_indices = @transform_0, window_bounds = array<i64: 8, 128>}, {transform_indices = @transform_1, window_bounds = array<i64: 128, 128>}, {transform_indices = @transform_2, window_bounds = array<i64: 1, 128>}, {transform_indices = @transform_3, window_bounds = array<i64: 128, 128>}, {pipeline_mode = #tpu.pipeline_mode<synchronous>, transform_indices = @transform_4, window_bounds = array<i64: 1, 128>}, {transform_indices = @transform_5, window_bounds = array<i64: 8, 128>}]} {
    %c0_i32 = arith.constant 0 : i32
    %0 = arith.cmpi eq, %arg1, %c0_i32 : i32
    %1 = arith.extui %0 : i1 to i32
    %c0_i32_0 = arith.constant 0 : i32
    %2 = arith.cmpi ne, %1, %c0_i32_0 : i32
    scf.if %2 {
      %cst_18 = arith.constant 0.000000e+00 : f32
      %25 = vector.broadcast %cst_18 : f32 to vector<8x128xf32>
      %c0_19 = arith.constant 0 : index
      %c0_20 = arith.constant 0 : index
      %26 = vector.load %arg8[%c0_19, %c0_20] : memref<8x128xf32, #tpu.memory_space<vmem>>, vector<8x128xf32>
      tpu.vector_store %arg8[%c0_19, %c0_20], %25 {strides = array<i32>} : memref<8x128xf32, #tpu.memory_space<vmem>>, vector<8x128xf32>,
    } else {
    }
    %c0 = arith.constant 0 : index
    %c0_1 = arith.constant 0 : index
    %3 = vector.load %arg2[%c0, %c0_1] : memref<8x128xf32, #tpu.memory_space<vmem>>, vector<8x128xf32>
    %c0_2 = arith.constant 0 : index
    %c0_3 = arith.constant 0 : index
    %4 = vector.load %arg3[%c0_2, %c0_3] : memref<128x128xf32, #tpu.memory_space<vmem>>, vector<128x128xf32>
    %cst = arith.constant dense<0.000000e+00> : vector<8x128xf32>
    %5 = tpu.matmul %3, %4, %cst {dimension_numbers = #tpu.dot_dimension_numbers<[1], [0], [0], [1], [0, 0, 1, 1], [], []>} : vector<8x128xf32>, vector<128x128xf32>, vector<8x128xf32> -> vector<8x128xf32>
    %c0_4 = arith.constant 0 : index
    %c0_5 = arith.constant 0 : index
    %6 = vector.load %arg4[%c0_4, %c0_5] : memref<1x128xf32, #tpu.memory_space<vmem>>, vector<1x128xf32>
    %7 = vector.broadcast %6 : vector<1x128xf32> to vector<8x128xf32>
    %8 = arith.addf %5, %7 : vector<8x128xf32>
    %cst_6 = arith.constant 5.000000e-01 : f32
    %9 = vector.broadcast %cst_6 : f32 to vector<8x128xf32>
    %10 = arith.mulf %9, %8 : vector<8x128xf32>
    %cst_7 = arith.constant 0.707106769 : f32
    %11 = vector.broadcast %cst_7 : f32 to vector<8x128xf32>
    %12 = arith.mulf %8, %11 : vector<8x128xf32>
    %13 = math.erf %12 : vector<8x128xf32>
    %cst_8 = arith.constant 1.000000e+00 : f32
    %14 = vector.broadcast %cst_8 : f32 to vector<8x128xf32>
    %15 = arith.addf %14, %13 : vector<8x128xf32>
    %16 = arith.mulf %10, %15 : vector<8x128xf32>
    %c0_9 = arith.constant 0 : index
    %c0_10 = arith.constant 0 : index
    %17 = vector.load %arg8[%c0_9, %c0_10] : memref<8x128xf32, #tpu.memory_space<vmem>>, vector<8x128xf32>
    %c0_11 = arith.constant 0 : index
    %c0_12 = arith.constant 0 : index
    %18 = vector.load %arg5[%c0_11, %c0_12] : memref<128x128xf32, #tpu.memory_space<vmem>>, vector<128x128xf32>
    %cst_13 = arith.constant dense<0.000000e+00> : vector<8x128xf32>
    %19 = tpu.matmul %16, %18, %cst_13 {dimension_numbers = #tpu.dot_dimension_numbers<[1], [0], [0], [1], [0, 0, 1, 1], [], []>} : vector<8x128xf32>, vector<128x128xf32>, vector<8x128xf32> -> vector<8x128xf32>
    %20 = arith.addf %17, %19 : vector<8x128xf32>
    %c0_14 = arith.constant 0 : index
    %c0_15 = arith.constant 0 : index
    %21 = vector.load %arg8[%c0_14, %c0_15] : memref<8x128xf32, #tpu.memory_space<vmem>>, vector<8x128xf32>
    tpu.vector_store %arg8[%c0_14, %c0_15], %20 {strides = array<i32>} : memref<8x128xf32, #tpu.memory_space<vmem>>, vector<8x128xf32>,
    %c0_i32_16 = arith.constant 0 : i32
    %22 = arith.cmpi eq, %arg1, %c0_i32_16 : i32
    %23 = arith.extui %22 : i1 to i32
    %c0_i32_17 = arith.constant 0 : i32
    %24 = arith.cmpi ne, %23, %c0_i32_17 : i32
    scf.if %24 {
      %c0_18 = arith.constant 0 : index
      %c0_19 = arith.constant 0 : index
      %25 = vector.load %arg8[%c0_18, %c0_19] : memref<8x128xf32, #tpu.memory_space<vmem>>, vector<8x128xf32>
      %c0_20 = arith.constant 0 : index
      %c0_21 = arith.constant 0 : index
      %26 = vector.load %arg6[%c0_20, %c0_21] : memref<1x128xf32, #tpu.memory_space<vmem>>, vector<1x128xf32>
      %27 = vector.broadcast %26 : vector<1x128xf32> to vector<8x128xf32>
      %28 = arith.addf %25, %27 : vector<8x128xf32>
      %c0_22 = arith.constant 0 : index
      %c0_23 = arith.constant 0 : index
      %29 = vector.load %arg7[%c0_22, %c0_23] : memref<8x128xf32, #tpu.memory_space<vmem>>, vector<8x128xf32>
      tpu.vector_store %arg7[%c0_22, %c0_23], %28 {strides = array<i32>} : memref<8x128xf32, #tpu.memory_space<vmem>>, vector<8x128xf32>,
    } else {
    }
    return
  }
  func.func @transform_0(%arg0: i32, %arg1: i32) -> (i32, i32) {
    %c0_i32 = arith.constant 0 : i32
    %c0_i32_0 = arith.constant 0 : i32
    return %arg0, %c0_i32 : i32, i32
  }
  func.func @transform_1(%arg0: i32, %arg1: i32) -> (i32, i32) {
    %c0_i32 = arith.constant 0 : i32
    %c0_i32_0 = arith.constant 0 : i32
    return %c0_i32, %arg1 : i32, i32
  }
  func.func @transform_2(%arg0: i32, %arg1: i32) -> (i32, i32) {
    %c0_i32 = arith.constant 0 : i32
    %c0_i32_0 = arith.constant 0 : i32
    return %c0_i32, %arg1 : i32, i32
  }
  func.func @transform_3(%arg0: i32, %arg1: i32) -> (i32, i32) {
    %c0_i32 = arith.constant 0 : i32
    %c0_i32_0 = arith.constant 0 : i32
    return %arg1, %c0_i32 : i32, i32
  }
  func.func @transform_4(%arg0: i32, %arg1: i32) -> (i32, i32) {
    %c0_i32 = arith.constant 0 : i32
    %c0_i32_0 = arith.constant 0 : i32
    %c0_i32_1 = arith.constant 0 : i32
    return %c0_i32, %c0_i32_0 : i32, i32
  }
  func.func @transform_5(%arg0: i32, %arg1: i32) -> (i32, i32) {
    %c0_i32 = arith.constant 0 : i32
    %c0_i32_0 = arith.constant 0 : i32
    return %arg0, %c0_i32 : i32, i32
  }
}

</mosaic_0001>

<llo_original>
// kernel: lora_ffn.1
$region0: #{lora_ffn.1}
  #allocation0 [shape = 'u32[]', space=smem, size = 0x4, offset = 0x4, fixed_abs, tag = 'smem constant byte address 0x4 - core index']
  #allocation1 [shape = 'u32[144,128]{1,0:T(1,128)}', space=vmem, size = 0x12000, scoped, tag = 'internal scratch']
  #allocation2 [shape = 'f32[8,128]{1,0:T(8,128)}', space=vmem, size = 0x1000, scoped, tag = 'scratch operand']
  %s0 = inlined_call_operand.vmem [shape: f32[16,128], index: 0, kind: input, shape index: {}]
  %s1 = inlined_call_operand.vmem [shape: f32[128,128], index: 1, kind: input, shape index: {}]
  %s2 = inlined_call_operand.vmem [shape: f32[1,128], index: 2, kind: input, shape index: {}]
  %s3 = inlined_call_operand.vmem [shape: f32[128,128], index: 3, kind: input, shape index: {}]
  %s4 = inlined_call_operand.vmem [shape: f32[1,128], index: 4, kind: input, shape index: {}]
  %s5 = inlined_call_operand.vmem [shape: f32[16,128], index: 5, kind: output, shape index: {}]
  %s6 = sld [smem:[#allocation0]]
  $region61: #{lora_ffn.1} parent=0
    _
  %s8 = ssub.s32 1, %s6
  %s9 = scalar_select 0, %s8, %s6
  loop: start=0, step=1, limit=4
  $region2: #{lora_ffn.1} parent=0 // loop_pre_header
    _
  $region3: #{lora_ffn.1} parent=0 // loop_header
    %s11 = sphi 0, %s15
    %p12 = scmp.ge.s32.totalorder %s11, 4
    %s18 = sphi 0, %s30
    %s19 = sphi 0, %s26
    %s20 = sphi 0, %s18
    %s21 = sphi 0, %s19
    %s22 = sphi 0, %s20
    %s23 = sphi 0, %s21
    %s33 = sphi 0, %s35
    %s36 = sphi 0, %s33
    %s37 = sphi 0, %s36
    %s53 = sphi 0, %s37
    %s59 = sphi 0, %s61
    %s62 = sphi 0, %s59
    %s63 = sphi 0, %s62
    %s79 = sphi 0, %s63
    %s85 = sphi 0, %s87
    %s88 = sphi 0, %s85
    %s89 = sphi 0, %s88
    %s105 = sphi 0, %s89
    %s111 = sphi 0, %s113
    %s114 = sphi 0, %s111
    %s115 = sphi 0, %s114
    %s131 = sphi 0, %s115
    %s135 = sphi 0, %s135
    %s137 = sphi 0, %s135
    %s138 = sphi 0, %s137
    %s152 = sphi 0, %s138
    %s158 = sphi 0, %s160
    %s161 = sphi 0, %s158
    %s162 = sphi 0, %s161
    %s178 = sphi 0, %s162
  $region4: #{lora_ffn.1} parent=0 // loop_header_branch
    %14 = sbr.rel (%p12) target = $region8
  $region5: #{lora_ffn.1} parent=0 // loop_body
    %s16 = ssub.s32 %s11, 1
    %s17 = ssub.s32 %s11, 2
    %s24 = sadd.s32 1, %s19
    %p25 = scmp.ge.s32.totalorder %s24, 1
    %s26 = scalar_select %p25, 0, %s24
    %s27 = sadd.s32 1, %s18
    %s28 = scalar_select %p25, %s27, %s18
    %p29 = scmp.ge.s32.totalorder %s28, 2
    %s30 = scalar_select %p29, 0, %s28
    %s31 = ssub.s32 %s18, %s30
    %p32 = scmp.eq.s32.totalorder %s31, 0
    %s34 = sadd.s32 %s33, 1
    %s35 = scalar_select %p32, %s33, %s34
    %p38 = pneg %p32
    %p39 = scmp.eq.s32.totalorder %s11, 1
    %p40 = por %p38, %p39
    %p41 = scmp.ne.s32.totalorder %s33, %s36
    %p42 = scmp.eq.s32.totalorder %s11, 0
    %p43 = por %p41, %p42
    %p44 = scmp.ne.s32.totalorder %s33, %s36
    %p45 = scmp.eq.s32.totalorder %s16, 1
    %p46 = por %p44, %p45
    %p47 = scmp.ne.s32.totalorder %s36, %s37
    %p48 = scmp.eq.s32.totalorder %s16, 0
    %p49 = por %p47, %p48
    %p50 = scmp.ne.s32.totalorder %s36, %s37
    %p51 = scmp.eq.s32.totalorder %s17, 1
    %p52 = por %p50, %p51
    %p54 = scmp.ne.s32.totalorder %s37, %s53
    %p55 = scmp.eq.s32.totalorder %s17, 0
    %p56 = por %p54, %p55
    %s57 = ssub.s32 %s19, %s26
    %p58 = scmp.eq.s32.totalorder %s57, 0
    %s60 = sadd.s32 %s59, 1
    %s61 = scalar_select %p58, %s59, %s60
    %p64 = pneg %p58
    %p65 = scmp.eq.s32.totalorder %s11, 1
    %p66 = por %p64, %p65
    %p67 = scmp.ne.s32.totalorder %s59, %s62
    %p68 = scmp.eq.s32.totalorder %s11, 0
    %p69 = por %p67, %p68
    %p70 = scmp.ne.s32.totalorder %s59, %s62
    %p71 = scmp.eq.s32.totalorder %s16, 1
    %p72 = por %p70, %p71
    %p73 = scmp.ne.s32.totalorder %s62, %s63
    %p74 = scmp.eq.s32.totalorder %s16, 0
    %p75 = por %p73, %p74
    %p76 = scmp.ne.s32.totalorder %s62, %s63
    %p77 = scmp.eq.s32.totalorder %s17, 1
    %p78 = por %p76, %p77
    %p80 = scmp.ne.s32.totalorder %s63, %s79
    %p81 = scmp.eq.s32.totalorder %s17, 0
    %p82 = por %p80, %p81
    %s83 = ssub.s32 %s19, %s26
    %p84 = scmp.eq.s32.totalorder %s83, 0
    %s86 = sadd.s32 %s85, 1
    %s87 = scalar_select %p84, %s85, %s86
    %p90 = pneg %p84
    %p91 = scmp.eq.s32.totalorder %s11, 1
    %p92 = por %p90, %p91
    %p93 = scmp.ne.s32.totalorder %s85, %s88
    %p94 = scmp.eq.s32.totalorder %s11, 0
    %p95 = por %p93, %p94
    %p96 = scmp.ne.s32.totalorder %s85, %s88
    %p97 = scmp.eq.s32.totalorder %s16, 1
    %p98 = por %p96, %p97
    %p99 = scmp.ne.s32.totalorder %s88, %s89
    %p100 = scmp.eq.s32.totalorder %s16, 0
    %p101 = por %p99, %p100
    %p102 = scmp.ne.s32.totalorder %s88, %s89
    %p103 = scmp.eq.s32.totalorder %s17, 1
    %p104 = por %p102, %p103
    %p106 = scmp.ne.s32.totalorder %s89, %s105
    %p107 = scmp.eq.s32.totalorder %s17, 0
    %p108 = por %p106, %p107
    %s109 = ssub.s32 %s19, %s26
    %p110 = scmp.eq.s32.totalorder %s109, 0
    %s112 = sadd.s32 %s111, 1
    %s113 = scalar_select %p110, %s111, %s112
    %p116 = pneg %p110
    %p117 = scmp.eq.s32.totalorder %s11, 1
    %p118 = por %p116, %p117
    %p119 = scmp.ne.s32.totalorder %s111, %s114
    %p120 = scmp.eq.s32.totalorder %s11, 0
    %p121 = por %p119, %p120
    %p122 = scmp.ne.s32.totalorder %s111, %s114
    %p123 = scmp.eq.s32.totalorder %s16, 1
    %p124 = por %p122, %p123
    %p125 = scmp.ne.s32.totalorder %s114, %s115
    %p126 = scmp.eq.s32.totalorder %s16, 0
    %p127 = por %p125, %p126
    %p128 = scmp.ne.s32.totalorder %s114, %s115
    %p129 = scmp.eq.s32.totalorder %s17, 1
    %p130 = por %p128, %p129
    %p132 = scmp.ne.s32.totalorder %s115, %s131
    %p133 = scmp.eq.s32.totalorder %s17, 0
    %p134 = por %p132, %p133
    %s136 = sadd.s32 %s135, 1
    %p139 = scmp.eq.s32.totalorder %s11, 1
    %p140 = scmp.ne.s32.totalorder %s135, %s137
    %p141 = scmp.eq.s32.totalorder %s11, 0
    %p142 = por %p140, %p141
    %p143 = scmp.ne.s32.totalorder %s135, %s137
    %p144 = scmp.eq.s32.totalorder %s16, 1
    %p145 = por %p143, %p144
    %p146 = scmp.ne.s32.totalorder %s137, %s138
    %p147 = scmp.eq.s32.totalorder %s16, 0
    %p148 = por %p146, %p147
    %p149 = scmp.ne.s32.totalorder %s137, %s138
    %p150 = scmp.eq.s32.totalorder %s17, 1
    %p151 = por %p149, %p150
    %p153 = scmp.ne.s32.totalorder %s138, %s152
    %p154 = scmp.eq.s32.totalorder %s17, 0
    %p155 = por %p153, %p154
    %s156 = ssub.s32 %s18, %s30
    %p157 = scmp.eq.s32.totalorder %s156, 0
    %s159 = sadd.s32 %s158, 1
    %s160 = scalar_select %p157, %s158, %s159
    %p163 = pneg %p157
    %p164 = scmp.eq.s32.totalorder %s11, 1
    %p165 = por %p163, %p164
    %p166 = scmp.ne.s32.totalorder %s158, %s161
    %p167 = scmp.eq.s32.totalorder %s11, 0
    %p168 = por %p166, %p167
    %p169 = scmp.ne.s32.totalorder %s158, %s161
    %p170 = scmp.eq.s32.totalorder %s16, 1
    %p171 = por %p169, %p170
    %p172 = scmp.ne.s32.totalorder %s161, %s162
    %p173 = scmp.eq.s32.totalorder %s16, 0
    %p174 = por %p172, %p173
    %p175 = scmp.ne.s32.totalorder %s161, %s162
    %p176 = scmp.eq.s32.totalorder %s17, 1
    %p177 = por %p175, %p176
    %p179 = scmp.ne.s32.totalorder %s162, %s178
    %p180 = scmp.eq.s32.totalorder %s17, 0
    %p181 = por %p179, %p180
    %p182 = scmp.le.s32.totalorder 1, %s11
    %p183 = scmp.lt.s32.totalorder %s11, 3
    %p184 = pnand %p182, %p183
    %p185 = pneg %p184
    // Predicated region
    $region9: #{lora_ffn.1} parent=5 // pred_check
      _
    $region10: #{lora_ffn.1} parent=5 // pred_check_branch
      %187 = sbr.rel (%p184) target = $region12
    $region11: #{lora_ffn.1} parent=5 // pred_region
      %s188 = ssub.s32 %s11, 1
      // Predicated region
      $region13: #{lora_ffn.1} parent=11 // pred_check
        %p189 = pneg %p75
      $region14: #{lora_ffn.1} parent=11 // pred_check_branch
        %191 = sbr.rel (%p189) target = $region16
      $region15: #{lora_ffn.1} parent=11 // pred_region
        %p192 = scmp.lt.s32.totalorder %s21, 0
        %s193 = scalar_select %p192, %s21, 0
        %s194 = smul.addr %s193, 8
        %s195 = scalar_lea.vmem %s1, %s194
      $region16: #{lora_ffn.1} parent=11 // pred_fallthru
        _
      // Predicated region
      $region17: #{lora_ffn.1} parent=11 // pred_check
        %p196 = pneg %p101
      $region18: #{lora_ffn.1} parent=11 // pred_check_branch
        %198 = sbr.rel (%p196) target = $region20
      $region19: #{lora_ffn.1} parent=11 // pred_region
        %p199 = scmp.lt.s32.totalorder %s21, 0
        %s200 = scalar_select %p199, %s21, 0
        %s201 = scalar_lea.vmem %s2, %s200
      $region20: #{lora_ffn.1} parent=11 // pred_fallthru
        _
      // Predicated region
      $region21: #{lora_ffn.1} parent=11 // pred_check
        %p202 = pneg %p127
      $region22: #{lora_ffn.1} parent=11 // pred_check_branch
        %204 = sbr.rel (%p202) target = $region24
      $region23: #{lora_ffn.1} parent=11 // pred_region
        %s205 = smul.u32 16, %s21
        %p206 = scmp.lt.s32.totalorder %s205, 15
        %s207 = scalar_select %p206, %s205, 15
        %s208 = smul.addr %s207, 8
        %s209 = scalar_lea.vmem %s3, %s208
        %s210 = smul.u32 16, %s21
      $region24: #{lora_ffn.1} parent=11 // pred_fallthru
        _
      // Predicated region
      $region25: #{lora_ffn.1} parent=11 // pred_check
        %p211 = pneg %p148
      $region26: #{lora_ffn.1} parent=11 // pred_check_branch
        %213 = sbr.rel (%p211) target = $region28
      $region27: #{lora_ffn.1} parent=11 // pred_region
        _
      $region28: #{lora_ffn.1} parent=11 // pred_fallthru
        _
    $region12: #{lora_ffn.1} parent=5 // pred_fallthru
      _
    %p214 = scmp.lt.s32.totalorder %s11, 2
    // Predicated region
    $region29: #{lora_ffn.1} parent=5 // pred_check
      %p215 = pneg %p214
    $region30: #{lora_ffn.1} parent=5 // pred_check_branch
      %217 = sbr.rel (%p215) target = $region32
    $region31: #{lora_ffn.1} parent=5 // pred_region
      // Predicated region
      $region33: #{lora_ffn.1} parent=31 // pred_check
        %p218 = pneg %p43
      $region34: #{lora_ffn.1} parent=31 // pred_check_branch
        %220 = sbr.rel (%p218) target = $region36
      $region35: #{lora_ffn.1} parent=31 // pred_region
        %p221 = scmp.lt.s32.totalorder %s18, 1
        %s222 = scalar_select %p221, %s18, 1
        %s223 = smul.addr %s222, 8
        %s224 = scalar_lea.vmem %s0, %s223
      $region36: #{lora_ffn.1} parent=31 // pred_fallthru
        _
    $region32: #{lora_ffn.1} parent=5 // pred_fallthru
      _
    %p225 = scmp.le.s32.totalorder 1, %s11
    %p226 = scmp.lt.s32.totalorder %s11, 3
    %p227 = pnand %p225, %p226
    %p228 = pneg %p227
    // Predicated region
    $region37: #{lora_ffn.1} parent=5 // pred_check
      _
    $region38: #{lora_ffn.1} parent=5 // pred_check_branch
      %230 = sbr.rel (%p227) target = $region40
    $region39: #{lora_ffn.1} parent=5 // pred_region
      %s231 = ssub.s32 %s11, 1
      %p232 = scmp.lt.s32.totalorder %s20, 1
      %s233 = scalar_select %p232, %s20, 1
      %s234 = smul.addr %s233, 8
      %s235 = scalar_lea.vmem %s0, %s234
      %p236 = pneg %p49
      %p237 = pneg %p46
      %p238 = scmp.lt.s32.totalorder %s21, 0
      %s239 = scalar_select %p238, %s21, 0
      %s240 = smul.addr %s239, 8
      %s241 = scalar_lea.vmem %s1, %s240
      %p242 = pneg %p75
      %p243 = pneg %p72
      %p244 = scmp.lt.s32.totalorder %s21, 0
      %s245 = scalar_select %p244, %s21, 0
      %s246 = scalar_lea.vmem %s2, %s245
      %p247 = pneg %p101
      %p248 = pneg %p98
      %s249 = smul.u32 16, %s21
      %p250 = scmp.lt.s32.totalorder %s249, 15
      %s251 = scalar_select %p250, %s249, 15
      %s252 = smul.addr %s251, 8
      %s253 = scalar_lea.vmem %s3, %s252
      %p254 = pneg %p127
      %p255 = pneg %p124
      %p256 = pneg %p148
      %p257 = pneg %p145
      %p258 = pneg %p174
      %p259 = pneg %p171
      %p260 = scmp.lt.s32.totalorder %s20, 1
      %s261 = scalar_select %p260, %s20, 1
      %s262 = smul.addr %s261, 8
      %s263 = scalar_lea.vmem %s5, %s262
      %p264 = scmp.lt.s32.totalorder %s20, 1
      %s265 = scalar_select %p264, %s20, 1
      %s266 = smul.addr %s265, 8
      %s267 = scalar_lea.vmem %s0, %s266
      %p268 = scmp.lt.s32.totalorder %s21, 0
      %s269 = scalar_select %p268, %s21, 0
      %s270 = smul.addr %s269, 8
      %s271 = scalar_lea.vmem %s1, %s270
      %p272 = scmp.lt.s32.totalorder %s21, 0
      %s273 = scalar_select %p272, %s21, 0
      %s274 = scalar_lea.vmem %s2, %s273
      %s275 = smul.u32 16, %s21
      %p276 = scmp.lt.s32.totalorder %s275, 15
      %s277 = scalar_select %p276, %s275, 15
      %s278 = smul.addr %s277, 8
      %s279 = scalar_lea.vmem %s3, %s278
      %s280 = smul.u32 16, %s21
      %p281 = scmp.lt.s32.totalorder %s20, 1
      %s282 = scalar_select %p281, %s20, 1
      %s283 = smul.addr %s282, 8
      %s284 = scalar_lea.vmem %s5, %s283
      %p285 = scmp.eq.s32.totalorder %s21, 0
      // Predicated region
      $region41: #{lora_ffn.1} parent=39 // pred_check
        %p286 = pneg %p285
      $region42: #{lora_ffn.1} parent=39 // pred_check_branch
        %288 = sbr.rel (%p286) target = $region44
      $region43: #{lora_ffn.1} parent=39 // pred_region
        %289 = vst [vmem:[#allocation2] sm:$0xff] 0.0
      $region44: #{lora_ffn.1} parent=39 // pred_fallthru
        _
      %v290 = vld [vmem:[%s267] sm:$0xff]
      %v291 = vld [vmem:[%s271] sm:$0xff]
      %v292 = vld [vmem:[%s271 + $0x8] sm:$0xff]
      %v293 = vld [vmem:[%s271 + $0x10] sm:$0xff]
      %v294 = vld [vmem:[%s271 + $0x18] sm:$0xff]
      %v295 = vld [vmem:[%s271 + $0x20] sm:$0xff]
      %v296 = vld [vmem:[%s271 + $0x28] sm:$0xff]
      %v297 = vld [vmem:[%s271 + $0x30] sm:$0xff]
      %v298 = vld [vmem:[%s271 + $0x38] sm:$0xff]
      %v299 = vld [vmem:[%s271 + $0x40] sm:$0xff]
      %v300 = vld [vmem:[%s271 + $0x48] sm:$0xff]
      %v301 = vld [vmem:[%s271 + $0x50] sm:$0xff]
      %v302 = vld [vmem:[%s271 + $0x58] sm:$0xff]
      %v303 = vld [vmem:[%s271 + $0x60] sm:$0xff]
      %v304 = vld [vmem:[%s271 + $0x68] sm:$0xff]
      %v305 = vld [vmem:[%s271 + $0x70] sm:$0xff]
      %v306 = vld [vmem:[%s271 + $0x78] sm:$0xff]
      %v307 = vld [vmem:[%s274] sm:$0x1]
      %v309 = vlaneseq
      %v310 = vshrl.u32 %v309, 7
      %v311 = vsub.s32 0, %v310
      %v312 = vrot.slane %v307, %v311
      %314 = vmatprep.subr.mxu0 0.0
      %315 = vmatpush1.msra.mxu0 %v291
      %316 = vmatprep.subr.mxu0 0.0
      %317 = vmatpush1.msra.mxu0 %v292
      %318 = vmatprep.subr.mxu0 0.0
      %319 = vmatpush1.msra.mxu0 %v293
      %320 = vmatprep.subr.mxu0 0.0
      %321 = vmatpush1.msra.mxu0 %v294
      %322 = vmatprep.subr.mxu0 0.0
      %323 = vmatpush1.msra.mxu0 %v295
      %324 = vmatprep.subr.mxu0 0.0
      %325 = vmatpush1.msra.mxu0 %v296
      %326 = vmatprep.subr.mxu0 0.0
      %327 = vmatpush1.msra.mxu0 %v297
      %328 = vmatprep.subr.mxu0 0.0
      %329 = vmatpush1.msra.mxu0 %v298
      %330 = vmatprep.subr.mxu0 0.0
      %331 = vmatpush1.msra.mxu0 %v299
      %332 = vmatprep.subr.mxu0 0.0
      %333 = vmatpush1.msra.mxu0 %v300
      %334 = vmatprep.subr.mxu0 0.0
      %335 = vmatpush1.msra.mxu0 %v301
      %336 = vmatprep.subr.mxu0 0.0
      %337 = vmatpush1.msra.mxu0 %v302
      %338 = vmatprep.subr.mxu0 0.0
      %339 = vmatpush1.msra.mxu0 %v303
      %340 = vmatprep.subr.mxu0 0.0
      %341 = vmatpush1.msra.mxu0 %v304
      %342 = vmatprep.subr.mxu0 0.0
      %343 = vmatpush1.msra.mxu0 %v305
      %344 = vmatprep.subr.mxu0 0.0
      %345 = vmatpush1.msra.mxu0 %v306
      %346 = vmatprep.subr.mxu0 0.0
      %347 = vmatpush1.msra.mxu0 0.0
      %348 = vmatprep.subr.mxu0 0.0
      %349 = vmatpush1.msra.mxu0 0.0
      %350 = vmatprep.subr.mxu0 0.0
      %351 = vmatpush1.msra.mxu0 0.0
      %352 = vmatprep.subr.mxu0 0.0
      %353 = vmatpush1.msra.mxu0 0.0
      %354 = vmatprep.subr.mxu0 0.0
      %355 = vmatpush1.msra.mxu0 0.0
      %356 = vmatprep.subr.mxu0 0.0
      %357 = vmatpush1.msra.mxu0 0.0
      %358 = vmatprep.subr.mxu0 0.0
      %359 = vmatpush1.msra.mxu0 0.0
      %360 = vmatprep.subr.mxu0 0.0
      %361 = vmatpush1.msra.mxu0 0.0
      %362 = vmatprep.subr.mxu0 0.0
      %363 = vmatpush1.msra.mxu0 0.0
      %364 = vmatprep.subr.mxu0 0.0
      %365 = vmatpush1.msra.mxu0 0.0
      %366 = vmatprep.subr.mxu0 0.0
      %367 = vmatpush1.msra.mxu0 0.0
      %368 = vmatprep.subr.mxu0 0.0
      %369 = vmatpush1.msra.mxu0 0.0
      %370 = vmatprep.subr.mxu0 0.0
      %371 = vmatpush1.msra.mxu0 0.0
      %372 = vmatprep.subr.mxu0 0.0
      %373 = vmatpush1.msra.mxu0 0.0
      %374 = vmatprep.subr.mxu0 0.0
      %375 = vmatpush1.msra.mxu0 0.0
      %376 = vmatprep.subr.mxu0 0.0
      %377 = vmatpush1.msra.mxu0 0.0
      %378 = vmatprep.mubr.f32.mxu0 0.0
      %379 = vmatmul.mubr.f32.gmra.mrb[0].mxu0 %v290
      %v380 = vpop.f32.mrb[0].mxu0
      %v381 = vadd.f32 %v312, %v380
      %v382 = vpop.f32.mrb[0].mxu0
      %383 = vdwg.mxu0
      %v384 = vmul.f32 %v381, 0.5
      %v385 = vmul.f32 %v381, 0.70710677
      %v386 = verf.f32.pop %v385
      %v387 = vadd.f32 %v386, 1.0
      %v388 = vmul.f32 %v384, %v387
      %v389 = vld [vmem:[#allocation2] sm:$0xff]
      %v390 = vld [vmem:[%s279] sm:$0xff]
      %v391 = vld [vmem:[%s279 + $0x8] sm:$0xff]
      %v392 = vld [vmem:[%s279 + $0x10] sm:$0xff]
      %v393 = vld [vmem:[%s279 + $0x18] sm:$0xff]
      %v394 = vld [vmem:[%s279 + $0x20] sm:$0xff]
      %v395 = vld [vmem:[%s279 + $0x28] sm:$0xff]
      %v396 = vld [vmem:[%s279 + $0x30] sm:$0xff]
      %v397 = vld [vmem:[%s279 + $0x38] sm:$0xff]
      %v398 = vld [vmem:[%s279 + $0x40] sm:$0xff]
      %v399 = vld [vmem:[%s279 + $0x48] sm:$0xff]
      %v400 = vld [vmem:[%s279 + $0x50] sm:$0xff]
      %v401 = vld [vmem:[%s279 + $0x58] sm:$0xff]
      %v402 = vld [vmem:[%s279 + $0x60] sm:$0xff]
      %v403 = vld [vmem:[%s279 + $0x68] sm:$0xff]
      %v404 = vld [vmem:[%s279 + $0x70] sm:$0xff]
      %v405 = vld [vmem:[%s279 + $0x78] sm:$0xff]
      %406 = vmatprep.subr.mxu0 0.0
      %407 = vmatpush1.msra.mxu0 %v390
      %408 = vmatprep.subr.mxu0 0.0
      %409 = vmatpush1.msra.mxu0 %v391
      %410 = vmatprep.subr.mxu0 0.0
      %411 = vmatpush1.msra.mxu0 %v392
      %412 = vmatprep.subr.mxu0 0.0
      %413 = vmatpush1.msra.mxu0 %v393
      %414 = vmatprep.subr.mxu0 0.0
      %415 = vmatpush1.msra.mxu0 %v394
      %416 = vmatprep.subr.mxu0 0.0
      %417 = vmatpush1.msra.mxu0 %v395
      %418 = vmatprep.subr.mxu0 0.0
      %419 = vmatpush1.msra.mxu0 %v396
      %420 = vmatprep.subr.mxu0 0.0
      %421 = vmatpush1.msra.mxu0 %v397
      %422 = vmatprep.subr.mxu0 0.0
      %423 = vmatpush1.msra.mxu0 %v398
      %424 = vmatprep.subr.mxu0 0.0
      %425 = vmatpush1.msra.mxu0 %v399
      %426 = vmatprep.subr.mxu0 0.0
      %427 = vmatpush1.msra.mxu0 %v400
      %428 = vmatprep.subr.mxu0 0.0
      %429 = vmatpush1.msra.mxu0 %v401
      %430 = vmatprep.subr.mxu0 0.0
      %431 = vmatpush1.msra.mxu0 %v402
      %432 = vmatprep.subr.mxu0 0.0
      %433 = vmatpush1.msra.mxu0 %v403
      %434 = vmatprep.subr.mxu0 0.0
      %435 = vmatpush1.msra.mxu0 %v404
      %436 = vmatprep.subr.mxu0 0.0
      %437 = vmatpush1.msra.mxu0 %v405
      %438 = vmatprep.subr.mxu0 0.0
      %439 = vmatpush1.msra.mxu0 0.0
      %440 = vmatprep.subr.mxu0 0.0
      %441 = vmatpush1.msra.mxu0 0.0
      %442 = vmatprep.subr.mxu0 0.0
      %443 = vmatpush1.msra.mxu0 0.0
      %444 = vmatprep.subr.mxu0 0.0
      %445 = vmatpush1.msra.mxu0 0.0
      %446 = vmatprep.subr.mxu0 0.0
      %447 = vmatpush1.msra.mxu0 0.0
      %448 = vmatprep.subr.mxu0 0.0
      %449 = vmatpush1.msra.mxu0 0.0
      %450 = vmatprep.subr.mxu0 0.0
      %451 = vmatpush1.msra.mxu0 0.0
      %452 = vmatprep.subr.mxu0 0.0
      %453 = vmatpush1.msra.mxu0 0.0
      %454 = vmatprep.subr.mxu0 0.0
      %455 = vmatpush1.msra.mxu0 0.0
      %456 = vmatprep.subr.mxu0 0.0
      %457 = vmatpush1.msra.mxu0 0.0
      %458 = vmatprep.subr.mxu0 0.0
      %459 = vmatpush1.msra.mxu0 0.0
      %460 = vmatprep.subr.mxu0 0.0
      %461 = vmatpush1.msra.mxu0 0.0
      %462 = vmatprep.subr.mxu0 0.0
      %463 = vmatpush1.msra.mxu0 0.0
      %464 = vmatprep.subr.mxu0 0.0
      %465 = vmatpush1.msra.mxu0 0.0
      %466 = vmatprep.subr.mxu0 0.0
      %467 = vmatpush1.msra.mxu0 0.0
      %468 = vmatprep.subr.mxu0 0.0
      %469 = vmatpush1.msra.mxu0 0.0
      %470 = vmatprep.mubr.f32.mxu0 0.0
      %471 = vmatmul.mubr.f32.gmra.mrb[0].mxu0 %v388
      %v472 = vpop.f32.mrb[0].mxu0
      %v473 = vadd.f32 0.0, %v472
      %v474 = vpop.f32.mrb[0].mxu0
      %475 = vdwg.mxu0
      %v476 = vadd.f32 %v389, %v473
      %477 = vst [vmem:[#allocation2] sm:$0xff] %v476
      // Predicated region
      $region45: #{lora_ffn.1} parent=39 // pred_check
        %p478 = pneg %p285
      $region46: #{lora_ffn.1} parent=39 // pred_check_branch
        %480 = sbr.rel (%p478) target = $region48
      $region47: #{lora_ffn.1} parent=39 // pred_region
        %v481 = vld [vmem:[#allocation2] sm:$0xff]
        %v482 = vld [vmem:[%s4] sm:$0x1]
        %v484 = vlaneseq
        %v485 = vshrl.u32 %v484, 7
        %v486 = vsub.s32 0, %v485
        %v487 = vrot.slane %v482, %v486
        %v489 = vadd.f32 %v481, %v487
        %490 = vst [vmem:[%s284] sm:$0xff] %v489
      $region48: #{lora_ffn.1} parent=39 // pred_fallthru
        _
      %p491 = scmp.lt.s32.totalorder %s20, 1
      %s492 = scalar_select %p491, %s20, 1
      %s493 = smul.addr %s492, 8
      %s494 = scalar_lea.vmem %s5, %s493
      // Predicated region
      $region49: #{lora_ffn.1} parent=39 // pred_check
        %p495 = pneg %p171
      $region50: #{lora_ffn.1} parent=39 // pred_check_branch
        %497 = sbr.rel (%p495) target = $region52
      $region51: #{lora_ffn.1} parent=39 // pred_region
        _
      $region52: #{lora_ffn.1} parent=39 // pred_fallthru
        _
    $region40: #{lora_ffn.1} parent=5 // pred_fallthru
      _
    %p498 = scmp.le.s32.totalorder 2, %s11
    // Predicated region
    $region53: #{lora_ffn.1} parent=5 // pred_check
      %p499 = pneg %p498
    $region54: #{lora_ffn.1} parent=5 // pred_check_branch
      %501 = sbr.rel (%p499) target = $region56
    $region55: #{lora_ffn.1} parent=5 // pred_region
      %s502 = ssub.s32 %s11, 2
      // Predicated region
      $region57: #{lora_ffn.1} parent=55 // pred_check
        %p503 = pneg %p177
      $region58: #{lora_ffn.1} parent=55 // pred_check_branch
        %505 = sbr.rel (%p503) target = $region60
      $region59: #{lora_ffn.1} parent=55 // pred_region
        %p506 = scmp.lt.s32.totalorder %s22, 1
        %s507 = scalar_select %p506, %s22, 1
        %s508 = smul.addr %s507, 8
        %s509 = scalar_lea.vmem %s5, %s508
      $region60: #{lora_ffn.1} parent=55 // pred_fallthru
        _
    $region56: #{lora_ffn.1} parent=5 // pred_fallthru
      _
  $region6: #{lora_ffn.1} parent=0 // loop_footer
    %s15 = sadd.s32 1, %s11
  $region7: #{lora_ffn.1} parent=0 // loop_footer_branch
    %10 = sbr.rel target = $region3
  $region8: #{lora_ffn.1} parent=0 // loop_exit
    _

</llo_original>
